<compile_context>
chip_gen: v5e
topology: v5e:2x2
jax: 0.10.0
libtpu: 0.0.40
codegen_flags: <defaults>
</compile_context>

<pallas_src>
import functools
import math

import numpy as np

import jax
import jax.numpy as jnp
from jax.experimental import pallas as pl
from jax.experimental.pallas import tpu as pltpu


_SEED_ROWS = 8                      # exact rows per block (one f32 sublane set)
_MAX_LANE_W = 4096                  # cap for the lane-folded row width
_TARGET_BLOCK_BYTES = 2 * 1024 * 1024


def _cdiv(a: int, b: int) -> int:
    return -(-a // b)


def _round_up(a: int, m: int) -> int:
    return _cdiv(a, m) * m


def _pe_rotation_kernel(seed_ref, rot_ref, o_ref, oth_ref, *,
                        block_rows: int, n_levels: int):
    """Generates one (block_rows, W) tile of the lane-folded PE table.

    seed_ref : (2*_SEED_ROWS, W) exact first rows of this block
               rows [0:8]  -> output plane   (sin on even cols, cos on odd cols)
               rows [8:16] -> companion plane (cos on even cols, sin on odd cols)
    rot_ref  : (2*n_levels, W) doubling tables; row 2k = cos(theta_k),
               row 2k+1 = parity-signed sin(theta_k), theta_k = 8*2^k*fold*w.
    o_ref    : output plane (written directly; no final select needed).
    oth_ref  : VMEM scratch for the companion plane.
    """
    # Exact seed rows (host-precomputed in float64 -> no in-kernel sin/cos).
    o_ref[0:_SEED_ROWS, :] = seed_ref[0:_SEED_ROWS, :]
    oth_ref[0:_SEED_ROWS, :] = seed_ref[_SEED_ROWS:2 * _SEED_ROWS, :]

    # Doubling: rows [cur : cur+nxt] = rotate(rows [0 : nxt], theta = cur*D).
    cur = _SEED_ROWS
    for k in range(n_levels):                      # static Python loop
        nxt = min(cur, block_rows - cur)
        cosd = rot_ref[2 * k:2 * k + 1, :]         # (1, W)
        sind = rot_ref[2 * k + 1:2 * k + 2, :]     # (1, W), parity-signed
        sel_lo = o_ref[0:nxt, :]
        oth_lo = oth_ref[0:nxt, :]
        o_ref[cur:cur + nxt, :] = sel_lo * cosd + oth_lo * sind
        if k + 1 < n_levels:                       # companion unused after last level
            oth_ref[cur:cur + nxt, :] = oth_lo * cosd - sel_lo * sind
        cur += nxt


def _pe_layout(hidden_size: int, max_len: int):
    """Lane-dense fold + row tiling choices."""
    if hidden_size % 128 == 0:
        lane_w, fold = hidden_size, 1
    else:
        lcm = hidden_size * 128 // math.gcd(hidden_size, 128)
        if lcm <= _MAX_LANE_W:
            lane_w, fold = lcm, lcm // hidden_size     # unmasked 128*m-lane stores
        else:
            lane_w, fold = hidden_size, 1              # rare widths: masked stores
    layout_rows = _cdiv(max_len, fold)

    rows_cap = max(_SEED_ROWS,
                   (_TARGET_BLOCK_BYTES // (lane_w * 4)) // _SEED_ROWS * _SEED_ROWS)
    # >= 2 grid steps so the parallel axis can shard across v7x's two TCs.
    half = _round_up(_cdiv(layout_rows, 2), _SEED_ROWS)
    block_rows = max(_SEED_ROWS, min(rows_cap, half))
    num_blocks = _cdiv(layout_rows, block_rows)

    n_levels = 0
    while _SEED_ROWS * (1 << n_levels) < block_rows:
        n_levels += 1
    return lane_w, fold, layout_rows, block_rows, num_blocks, n_levels


def build_pe_table(hidden_size: int, max_len: int = 4096) -> jax.Array:
    """Builds the full (1, max_len, hidden_size) sinusoidal PE table on TPU."""
    assert hidden_size % 2 == 0, (
        f"Cannot use sin/cos positional encoding with odd hidden_size "
        f"(got size={hidden_size}).")

    lane_w, fold, layout_rows, block_rows, num_blocks, n_levels = _pe_layout(
        hidden_size, max_len)

    # ---- host-side (float64) constant tables -------------------------------
    # Frequencies computed exactly as the reference / PyTorch module (f32 exp),
    # then upcast to f64 for building seeds + rotation matrices.
    div_term_f32 = jnp.exp(
        jnp.arange(0, hidden_size, 2, dtype=jnp.float32)
        * (-math.log(10000.0) / hidden_size))
    w_pair = np.asarray(jax.device_get(div_term_f32), dtype=np.float64)

    lane = np.arange(lane_w)
    col = lane % hidden_size                                   # feature column
    pos_off = (lane // hidden_size).astype(np.float64)         # fold offset
    w_lane = w_pair[col // 2]                                  # per-lane freq
    parity = (col % 2).astype(np.float64)                      # 1.0 on cos cols
    sign = 1.0 - 2.0 * parity                                  # +1 sin, -1 cos

    # Per-block exact seeds (first _SEED_ROWS layout rows of every block).
    blk = np.arange(num_blocks, dtype=np.float64)[:, None, None]
    row = np.arange(_SEED_ROWS, dtype=np.float64)[None, :, None]
    pos = (blk * block_rows + row) * fold + pos_off[None, None, :]
    ang = pos * w_lane[None, None, :]
    sin_a, cos_a = np.sin(ang), np.cos(ang)
    is_cos = parity[None, None, :] > 0.5
    sel = np.where(is_cos, cos_a, sin_a)                       # output plane
    oth = np.where(is_cos, sin_a, cos_a)                       # companion plane
    seed = np.concatenate([sel, oth], axis=1).reshape(
        num_blocks * 2 * _SEED_ROWS, lane_w).astype(np.float32)

    # Doubling rotation tables: level k rotates by 8*2^k layout rows.
    rot_rows = []
    for k in range(n_levels):
        theta = (_SEED_ROWS * (1 << k) * fold) * w_lane
        rot_rows.append(np.cos(theta))
        rot_rows.append(np.sin(theta) * sign)                  # parity-signed
    rot = (np.stack(rot_rows) if rot_rows
           else np.zeros((2, lane_w))).astype(np.float32)

    # ---- Pallas call --------------------------------------------------------
    kernel = functools.partial(_pe_rotation_kernel,
                               block_rows=block_rows, n_levels=n_levels)
    cost = pl.CostEstimate(
        flops=6 * layout_rows * lane_w,
        transcendentals=0,
        bytes_accessed=4 * (layout_rows * lane_w + seed.size + rot.size))

    pe_folded = pl.pallas_call(
        kernel,
        out_shape=jax.ShapeDtypeStruct((layout_rows, lane_w), jnp.float32),
        grid_spec=pltpu.PrefetchScalarGridSpec(
            num_scalar_prefetch=0,
            grid=(num_blocks,),
            in_specs=[
                # per-block seed rows (16, W)
                pl.BlockSpec((2 * _SEED_ROWS, lane_w), lambda i: (i, 0)),
                # resident rotation table
                pl.BlockSpec((rot.shape[0], lane_w), lambda i: (0, 0)),
            ],
            out_specs=pl.BlockSpec((block_rows, lane_w), lambda i: (i, 0)),
            scratch_shapes=[pltpu.VMEM((block_rows, lane_w), jnp.float32)],
        ),
        compiler_params=pltpu.CompilerParams(
            dimension_semantics=("parallel",)),
        cost_estimate=cost,
    )(jnp.asarray(seed), jnp.asarray(rot))

    # Row-major (contiguous, free) un-fold back to (positions, hidden).
    pe = pe_folded.reshape(layout_rows * fold, hidden_size)[:max_len]
    return pe[None, :, :]


class PositionalEncoding:
    """Pallas-backed equivalent of the PyTorch module: the table is generated
    once at construction; forward(seq_len) is a metadata-cheap slice."""

    def __init__(self, hidden_size: int, max_len: int = 4096):
        self.hidden_size = hidden_size
        self.max_len = max_len
        self.pe = jax.block_until_ready(build_pe_table(hidden_size, max_len))

    def __call__(self, seq_len: int) -> jax.Array:
        return self.pe[:, :seq_len, :]

    forward = __call__


def _reference(hidden_size: int, max_len: int = 4096) -> jax.Array:
    # Pure-JAX mirror of the PyTorch __init__ math (full table).
    position = jnp.arange(0, max_len, dtype=jnp.float32)[:, None]
    div_term = jnp.exp(jnp.arange(0, hidden_size, 2, dtype=jnp.float32)
                       * (-math.log(10000.0) / hidden_size))
    pe = jnp.zeros((max_len, hidden_size), dtype=jnp.float32)
    pe = pe.at[:, 0::2].set(jnp.sin(position * div_term))
    pe = pe.at[:, 1::2].set(jnp.cos(position * div_term))
    return pe[None, :, :]


if __name__ == "__main__":
    _ = jax.random.PRNGKey(0)   # forward takes only an int seq_len; kept for convention

    hidden_size, max_len, seq_len = 32, 4096, 8

    module = PositionalEncoding(hidden_size, max_len=max_len)
    out = jax.block_until_ready(module(seq_len))

    assert out.shape == (1, seq_len, hidden_size)
    assert out.dtype == jnp.float32

    ref = _reference(hidden_size, max_len)
    # Strict check on the forward output (module semantics: pe[:, :seq_len, :]).
    assert jnp.allclose(out, ref[:, :seq_len, :], atol=1e-5, rtol=1e-5)
    # Sanity-check the rotation recurrence over the whole cached table.  The
    # residual is dominated by the *reference's* own single-f32 rounding of
    # large angles (~1.2e-4 near position 4096), not by recurrence drift (~1e-6).
    assert jnp.allclose(module.pe, ref, atol=5e-4, rtol=0.0)

    print("KERNEL_OK")
</pallas_src>

<mosaic_0001>
module attributes {stable_mosaic.version = 11 : i64} {
  func.func @_pe_rotation_kernel(%arg0: i32, %arg1: memref<16x128xf32, #tpu.memory_space<vmem>>, %arg2: memref<12x128xf32, #tpu.memory_space<vmem>>, %arg3: memref<512x128xf32, #tpu.memory_space<vmem>>, %arg4: memref<512x128xf32, #tpu.memory_space<vmem>>) attributes {dimension_semantics = [#tpu.dimension_semantics<parallel>], iteration_bounds = array<i64: 2>, scalar_prefetch = 0 : i64, scratch_operands = 1 : i64, tpu.core_type = #tpu.core_type<tc>, window_params = [{transform_indices = @transform_0, window_bounds = array<i64: 16, 128>}, {pipeline_mode = #tpu.pipeline_mode<synchronous>, transform_indices = @transform_1, window_bounds = array<i64: 12, 128>}, {transform_indices = @transform_2, window_bounds = array<i64: 512, 128>}]} {
    %c0 = arith.constant 0 : index
    %c0_0 = arith.constant 0 : index
    %0 = vector.load %arg1[%c0, %c0_0] : memref<16x128xf32, #tpu.memory_space<vmem>>, vector<8x128xf32>
    %c0_1 = arith.constant 0 : index
    %c0_2 = arith.constant 0 : index
    %1 = vector.load %arg3[%c0_1, %c0_2] : memref<512x128xf32, #tpu.memory_space<vmem>>, vector<8x128xf32>
    tpu.vector_store %arg3[%c0_1, %c0_2], %0 {strides = array<i32>} : memref<512x128xf32, #tpu.memory_space<vmem>>, vector<8x128xf32>,
    %c8 = arith.constant 8 : index
    %c0_3 = arith.constant 0 : index
    %2 = vector.load %arg1[%c8, %c0_3] : memref<16x128xf32, #tpu.memory_space<vmem>>, vector<8x128xf32>
    %c0_4 = arith.constant 0 : index
    %c0_5 = arith.constant 0 : index
    %3 = vector.load %arg4[%c0_4, %c0_5] : memref<512x128xf32, #tpu.memory_space<vmem>>, vector<8x128xf32>
    tpu.vector_store %arg4[%c0_4, %c0_5], %2 {strides = array<i32>} : memref<512x128xf32, #tpu.memory_space<vmem>>, vector<8x128xf32>,
    %c0_6 = arith.constant 0 : index
    %c0_7 = arith.constant 0 : index
    %4 = vector.load %arg2[%c0_6, %c0_7] : memref<12x128xf32, #tpu.memory_space<vmem>>, vector<1x128xf32>
    %c1 = arith.constant 1 : index
    %c0_8 = arith.constant 0 : index
    %5 = vector.load %arg2[%c1, %c0_8] : memref<12x128xf32, #tpu.memory_space<vmem>>, vector<1x128xf32>
    %c0_9 = arith.constant 0 : index
    %c0_10 = arith.constant 0 : index
    %6 = vector.load %arg3[%c0_9, %c0_10] : memref<512x128xf32, #tpu.memory_space<vmem>>, vector<8x128xf32>
    %c0_11 = arith.constant 0 : index
    %c0_12 = arith.constant 0 : index
    %7 = vector.load %arg4[%c0_11, %c0_12] : memref<512x128xf32, #tpu.memory_space<vmem>>, vector<8x128xf32>
    %8 = vector.broadcast %4 : vector<1x128xf32> to vector<8x128xf32>
    %9 = arith.mulf %6, %8 : vector<8x128xf32>
    %10 = vector.broadcast %5 : vector<1x128xf32> to vector<8x128xf32>
    %11 = arith.mulf %7, %10 : vector<8x128xf32>
    %12 = arith.addf %9, %11 : vector<8x128xf32>
    %c8_13 = arith.constant 8 : index
    %c0_14 = arith.constant 0 : index
    %13 = vector.load %arg3[%c8_13, %c0_14] : memref<512x128xf32, #tpu.memory_space<vmem>>, vector<8x128xf32>
    tpu.vector_store %arg3[%c8_13, %c0_14], %12 {strides = array<i32>} : memref<512x128xf32, #tpu.memory_space<vmem>>, vector<8x128xf32>,
    %14 = vector.broadcast %4 : vector<1x128xf32> to vector<8x128xf32>
    %15 = arith.mulf %7, %14 : vector<8x128xf32>
    %16 = vector.broadcast %5 : vector<1x128xf32> to vector<8x128xf32>
    %17 = arith.mulf %6, %16 : vector<8x128xf32>
    %18 = arith.subf %15, %17 : vector<8x128xf32>
    %c8_15 = arith.constant 8 : index
    %c0_16 = arith.constant 0 : index
    %19 = vector.load %arg4[%c8_15, %c0_16] : memref<512x128xf32, #tpu.memory_space<vmem>>, vector<8x128xf32>
    tpu.vector_store %arg4[%c8_15, %c0_16], %18 {strides = array<i32>} : memref<512x128xf32, #tpu.memory_space<vmem>>, vector<8x128xf32>,
    %c2 = arith.constant 2 : index
    %c0_17 = arith.constant 0 : index
    %20 = vector.load %arg2[%c2, %c0_17] : memref<12x128xf32, #tpu.memory_space<vmem>>, vector<1x128xf32>
    %c3 = arith.constant 3 : index
    %c0_18 = arith.constant 0 : index
    %21 = vector.load %arg2[%c3, %c0_18] : memref<12x128xf32, #tpu.memory_space<vmem>>, vector<1x128xf32>
    %c0_19 = arith.constant 0 : index
    %c0_20 = arith.constant 0 : index
    %22 = vector.load %arg3[%c0_19, %c0_20] : memref<512x128xf32, #tpu.memory_space<vmem>>, vector<16x128xf32>
    %c0_21 = arith.constant 0 : index
    %c0_22 = arith.constant 0 : index
    %23 = vector.load %arg4[%c0_21, %c0_22] : memref<512x128xf32, #tpu.memory_space<vmem>>, vector<16x128xf32>
    %24 = vector.broadcast %20 : vector<1x128xf32> to vector<16x128xf32>
    %25 = arith.mulf %22, %24 : vector<16x128xf32>
    %26 = vector.broadcast %21 : vector<1x128xf32> to vector<16x128xf32>
    %27 = arith.mulf %23, %26 : vector<16x128xf32>
    %28 = arith.addf %25, %27 : vector<16x128xf32>
    %c16 = arith.constant 16 : index
    %c0_23 = arith.constant 0 : index
    %29 = vector.load %arg3[%c16, %c0_23] : memref<512x128xf32, #tpu.memory_space<vmem>>, vector<16x128xf32>
    tpu.vector_store %arg3[%c16, %c0_23], %28 {strides = array<i32>} : memref<512x128xf32, #tpu.memory_space<vmem>>, vector<16x128xf32>,
    %30 = vector.broadcast %20 : vector<1x128xf32> to vector<16x128xf32>
    %31 = arith.mulf %23, %30 : vector<16x128xf32>
    %32 = vector.broadcast %21 : vector<1x128xf32> to vector<16x128xf32>
    %33 = arith.mulf %22, %32 : vector<16x128xf32>
    %34 = arith.subf %31, %33 : vector<16x128xf32>
    %c16_24 = arith.constant 16 : index
    %c0_25 = arith.constant 0 : index
    %35 = vector.load %arg4[%c16_24, %c0_25] : memref<512x128xf32, #tpu.memory_space<vmem>>, vector<16x128xf32>
    tpu.vector_store %arg4[%c16_24, %c0_25], %34 {strides = array<i32>} : memref<512x128xf32, #tpu.memory_space<vmem>>, vector<16x128xf32>,
    %c4 = arith.constant 4 : index
    %c0_26 = arith.constant 0 : index
    %36 = vector.load %arg2[%c4, %c0_26] : memref<12x128xf32, #tpu.memory_space<vmem>>, vector<1x128xf32>
    %c5 = arith.constant 5 : index
    %c0_27 = arith.constant 0 : index
    %37 = vector.load %arg2[%c5, %c0_27] : memref<12x128xf32, #tpu.memory_space<vmem>>, vector<1x128xf32>
    %c0_28 = arith.constant 0 : index
    %c0_29 = arith.constant 0 : index
    %38 = vector.load %arg3[%c0_28, %c0_29] : memref<512x128xf32, #tpu.memory_space<vmem>>, vector<32x128xf32>
    %c0_30 = arith.constant 0 : index
    %c0_31 = arith.constant 0 : index
    %39 = vector.load %arg4[%c0_30, %c0_31] : memref<512x128xf32, #tpu.memory_space<vmem>>, vector<32x128xf32>
    %40 = vector.broadcast %36 : vector<1x128xf32> to vector<32x128xf32>
    %41 = arith.mulf %38, %40 : vector<32x128xf32>
    %42 = vector.broadcast %37 : vector<1x128xf32> to vector<32x128xf32>
    %43 = arith.mulf %39, %42 : vector<32x128xf32>
    %44 = arith.addf %41, %43 : vector<32x128xf32>
    %c32 = arith.constant 32 : index
    %c0_32 = arith.constant 0 : index
    %45 = vector.load %arg3[%c32, %c0_32] : memref<512x128xf32, #tpu.memory_space<vmem>>, vector<32x128xf32>
    tpu.vector_store %arg3[%c32, %c0_32], %44 {strides = array<i32>} : memref<512x128xf32, #tpu.memory_space<vmem>>, vector<32x128xf32>,
    %46 = vector.broadcast %36 : vector<1x128xf32> to vector<32x128xf32>
    %47 = arith.mulf %39, %46 : vector<32x128xf32>
    %48 = vector.broadcast %37 : vector<1x128xf32> to vector<32x128xf32>
    %49 = arith.mulf %38, %48 : vector<32x128xf32>
    %50 = arith.subf %47, %49 : vector<32x128xf32>
    %c32_33 = arith.constant 32 : index
    %c0_34 = arith.constant 0 : index
    %51 = vector.load %arg4[%c32_33, %c0_34] : memref<512x128xf32, #tpu.memory_space<vmem>>, vector<32x128xf32>
    tpu.vector_store %arg4[%c32_33, %c0_34], %50 {strides = array<i32>} : memref<512x128xf32, #tpu.memory_space<vmem>>, vector<32x128xf32>,
    %c6 = arith.constant 6 : index
    %c0_35 = arith.constant 0 : index
    %52 = vector.load %arg2[%c6, %c0_35] : memref<12x128xf32, #tpu.memory_space<vmem>>, vector<1x128xf32>
    %c7 = arith.constant 7 : index
    %c0_36 = arith.constant 0 : index
    %53 = vector.load %arg2[%c7, %c0_36] : memref<12x128xf32, #tpu.memory_space<vmem>>, vector<1x128xf32>
    %c0_37 = arith.constant 0 : index
    %c0_38 = arith.constant 0 : index
    %54 = vector.load %arg3[%c0_37, %c0_38] : memref<512x128xf32, #tpu.memory_space<vmem>>, vector<64x128xf32>
    %c0_39 = arith.constant 0 : index
    %c0_40 = arith.constant 0 : index
    %55 = vector.load %arg4[%c0_39, %c0_40] : memref<512x128xf32, #tpu.memory_space<vmem>>, vector<64x128xf32>
    %56 = vector.broadcast %52 : vector<1x128xf32> to vector<64x128xf32>
    %57 = arith.mulf %54, %56 : vector<64x128xf32>
    %58 = vector.broadcast %53 : vector<1x128xf32> to vector<64x128xf32>
    %59 = arith.mulf %55, %58 : vector<64x128xf32>
    %60 = arith.addf %57, %59 : vector<64x128xf32>
    %c64 = arith.constant 64 : index
    %c0_41 = arith.constant 0 : index
    %61 = vector.load %arg3[%c64, %c0_41] : memref<512x128xf32, #tpu.memory_space<vmem>>, vector<64x128xf32>
    tpu.vector_store %arg3[%c64, %c0_41], %60 {strides = array<i32>} : memref<512x128xf32, #tpu.memory_space<vmem>>, vector<64x128xf32>,
    %62 = vector.broadcast %52 : vector<1x128xf32> to vector<64x128xf32>
    %63 = arith.mulf %55, %62 : vector<64x128xf32>
    %64 = vector.broadcast %53 : vector<1x128xf32> to vector<64x128xf32>
    %65 = arith.mulf %54, %64 : vector<64x128xf32>
    %66 = arith.subf %63, %65 : vector<64x128xf32>
    %c64_42 = arith.constant 64 : index
    %c0_43 = arith.constant 0 : index
    %67 = vector.load %arg4[%c64_42, %c0_43] : memref<512x128xf32, #tpu.memory_space<vmem>>, vector<64x128xf32>
    tpu.vector_store %arg4[%c64_42, %c0_43], %66 {strides = array<i32>} : memref<512x128xf32, #tpu.memory_space<vmem>>, vector<64x128xf32>,
    %c8_44 = arith.constant 8 : index
    %c0_45 = arith.constant 0 : index
    %68 = vector.load %arg2[%c8_44, %c0_45] : memref<12x128xf32, #tpu.memory_space<vmem>>, vector<1x128xf32>
    %c9 = arith.constant 9 : index
    %c0_46 = arith.constant 0 : index
    %69 = vector.load %arg2[%c9, %c0_46] : memref<12x128xf32, #tpu.memory_space<vmem>>, vector<1x128xf32>
    %c0_47 = arith.constant 0 : index
    %c0_48 = arith.constant 0 : index
    %70 = vector.load %arg3[%c0_47, %c0_48] : memref<512x128xf32, #tpu.memory_space<vmem>>, vector<128x128xf32>
    %c0_49 = arith.constant 0 : index
    %c0_50 = arith.constant 0 : index
    %71 = vector.load %arg4[%c0_49, %c0_50] : memref<512x128xf32, #tpu.memory_space<vmem>>, vector<128x128xf32>
    %72 = vector.broadcast %68 : vector<1x128xf32> to vector<128x128xf32>
    %73 = arith.mulf %70, %72 : vector<128x128xf32>
    %74 = vector.broadcast %69 : vector<1x128xf32> to vector<128x128xf32>
    %75 = arith.mulf %71, %74 : vector<128x128xf32>
    %76 = arith.addf %73, %75 : vector<128x128xf32>
    %c128 = arith.constant 128 : index
    %c0_51 = arith.constant 0 : index
    %77 = vector.load %arg3[%c128, %c0_51] : memref<512x128xf32, #tpu.memory_space<vmem>>, vector<128x128xf32>
    tpu.vector_store %arg3[%c128, %c0_51], %76 {strides = array<i32>} : memref<512x128xf32, #tpu.memory_space<vmem>>, vector<128x128xf32>,
    %78 = vector.broadcast %68 : vector<1x128xf32> to vector<128x128xf32>
    %79 = arith.mulf %71, %78 : vector<128x128xf32>
    %80 = vector.broadcast %69 : vector<1x128xf32> to vector<128x128xf32>
    %81 = arith.mulf %70, %80 : vector<128x128xf32>
    %82 = arith.subf %79, %81 : vector<128x128xf32>
    %c128_52 = arith.constant 128 : index
    %c0_53 = arith.constant 0 : index
    %83 = vector.load %arg4[%c128_52, %c0_53] : memref<512x128xf32, #tpu.memory_space<vmem>>, vector<128x128xf32>
    tpu.vector_store %arg4[%c128_52, %c0_53], %82 {strides = array<i32>} : memref<512x128xf32, #tpu.memory_space<vmem>>, vector<128x128xf32>,
    %c10 = arith.constant 10 : index
    %c0_54 = arith.constant 0 : index
    %84 = vector.load %arg2[%c10, %c0_54] : memref<12x128xf32, #tpu.memory_space<vmem>>, vector<1x128xf32>
    %c11 = arith.constant 11 : index
    %c0_55 = arith.constant 0 : index
    %85 = vector.load %arg2[%c11, %c0_55] : memref<12x128xf32, #tpu.memory_space<vmem>>, vector<1x128xf32>
    %c0_56 = arith.constant 0 : index
    %c0_57 = arith.constant 0 : index
    %86 = vector.load %arg3[%c0_56, %c0_57] : memref<512x128xf32, #tpu.memory_space<vmem>>, vector<256x128xf32>
    %c0_58 = arith.constant 0 : index
    %c0_59 = arith.constant 0 : index
    %87 = vector.load %arg4[%c0_58, %c0_59] : memref<512x128xf32, #tpu.memory_space<vmem>>, vector<256x128xf32>
    %88 = vector.broadcast %84 : vector<1x128xf32> to vector<256x128xf32>
    %89 = arith.mulf %86, %88 : vector<256x128xf32>
    %90 = vector.broadcast %85 : vector<1x128xf32> to vector<256x128xf32>
    %91 = arith.mulf %87, %90 : vector<256x128xf32>
    %92 = arith.addf %89, %91 : vector<256x128xf32>
    %c256 = arith.constant 256 : index
    %c0_60 = arith.constant 0 : index
    %93 = vector.load %arg3[%c256, %c0_60] : memref<512x128xf32, #tpu.memory_space<vmem>>, vector<256x128xf32>
    tpu.vector_store %arg3[%c256, %c0_60], %92 {strides = array<i32>} : memref<512x128xf32, #tpu.memory_space<vmem>>, vector<256x128xf32>,
    return
  }
  func.func @transform_0(%arg0: i32) -> (i32, i32) {
    %c0_i32 = arith.constant 0 : i32
    %c0_i32_0 = arith.constant 0 : i32
    return %arg0, %c0_i32 : i32, i32
  }
  func.func @transform_1(%arg0: i32) -> (i32, i32) {
    %c0_i32 = arith.constant 0 : i32
    %c0_i32_0 = arith.constant 0 : i32
    %c0_i32_1 = arith.constant 0 : i32
    return %c0_i32, %c0_i32_0 : i32, i32
  }
  func.func @transform_2(%arg0: i32) -> (i32, i32) {
    %c0_i32 = arith.constant 0 : i32
    %c0_i32_0 = arith.constant 0 : i32
    return %arg0, %c0_i32 : i32, i32
  }
}

</mosaic_0001>

<llo_original>
// kernel: tpu_custom_call.1
$region0: #{tpu_custom_call.1}
  #allocation0 [shape = 'u32[]', space=smem, size = 0x4, offset = 0x4, fixed_abs, tag = 'smem constant byte address 0x4 - core index']
  #allocation1 [shape = 'u32[72,128]{1,0:T(1,128)}', space=vmem, size = 0x9000, scoped, tag = 'internal scratch']
  #allocation2 [shape = 'f32[512,128]{1,0:T(8,128)}', space=vmem, size = 0x40000, scoped, tag = 'scratch operand']
  %s0 = inlined_call_operand.hbm [shape: f32[32,128], index: 0, kind: input, shape index: {}]
  %s1 = inlined_call_operand.hbm [shape: f32[12,128], index: 1, kind: input, shape index: {}]
  %s2 = inlined_call_operand.hbm [shape: f32[1024,128], index: 2, kind: output, shape index: {}]
  %s3 = sld [smem:[#allocation0]]
  $region49: #{tpu_custom_call.1} parent=0
    _
  %s5 = ssub.s32 1, %s3
  %s6 = scalar_select 0, %s5, %s3
  $region1: #{tpu_custom_call.1} parent=0
    #allocation3 [shape = 'u8[16384]{0}', space=vmem, size = 0x4000, scoped, tag = 'input window, operand 0']
    #allocation4 [shape = 's32[2]{0}', space=sflag, size = 0x8, scoped, tag = 'scoped memory for tpu_custom_call.1']
    #allocation5 [shape = 's32[2]{0}', space=sflag, size = 0x8, scoped, tag = 'scoped memory for tpu_custom_call.1']
    #allocation6 [shape = 'u8[8192]{0}', space=vmem, size = 0x2000, scoped, tag = 'input window, operand 1, single buffered']
    #allocation7 [shape = 's32[1]{0}', space=sflag, size = 0x4, scoped, tag = 'scoped memory for tpu_custom_call.1']
    #allocation8 [shape = 'u8[524288]{0}', space=vmem, size = 0x80000, scoped, tag = 'output window, operand 0']
    %7 = vsyncpa [#allocation4], 0
    %s8 = scalar_lea.sflag [#allocation4], 1
    %9 = vsyncpa %s8, 0
    %10 = vsyncpa [#allocation7], 0
    %11 = vsyncpa [#allocation5], 0
    %s12 = scalar_lea.sflag [#allocation5], 1
    %13 = vsyncpa %s12, 0
    loop: start=0, step=1, limit=4
    $region2: #{tpu_custom_call.1} parent=1 // loop_pre_header
      _
    $region3: #{tpu_custom_call.1} parent=1 // loop_header
      %s15 = sphi 0, %s19
      %p16 = scmp.ge.s32.totalorder %s15, 4
      %s25 = sphi 0, %s27
      %s28 = sphi 0, %s25
      %s29 = sphi 0, %s28
      %s45 = sphi 0, %s29
      %s49 = sphi 0, %s49
      %s51 = sphi 0, %s49
      %s52 = sphi 0, %s51
      %s66 = sphi 0, %s52
      %s72 = sphi 0, %s74
      %s75 = sphi 0, %s72
      %s76 = sphi 0, %s75
      %s92 = sphi 0, %s76
    $region4: #{tpu_custom_call.1} parent=1 // loop_header_branch
      %18 = sbr.rel (%p16) target = $region8
    $region5: #{tpu_custom_call.1} parent=1 // loop_body
      %s20 = ssub.s32 %s15, 1
      %s21 = ssub.s32 %s15, 2
      %s22 = sadd.s32 %s15, 1
      %s23 = ssub.s32 %s15, %s22
      %p24 = scmp.eq.s32.totalorder %s23, 0
      %s26 = sadd.s32 %s25, 1
      %s27 = scalar_select %p24, %s25, %s26
      %p30 = pneg %p24
      %p31 = scmp.eq.s32.totalorder %s15, 1
      %p32 = por %p30, %p31
      %p33 = scmp.ne.s32.totalorder %s25, %s28
      %p34 = scmp.eq.s32.totalorder %s15, 0
      %p35 = por %p33, %p34
      %p36 = scmp.ne.s32.totalorder %s25, %s28
      %p37 = scmp.eq.s32.totalorder %s20, 1
      %p38 = por %p36, %p37
      %p39 = scmp.ne.s32.totalorder %s28, %s29
      %p40 = scmp.eq.s32.totalorder %s20, 0
      %p41 = por %p39, %p40
      %p42 = scmp.ne.s32.totalorder %s28, %s29
      %p43 = scmp.eq.s32.totalorder %s21, 1
      %p44 = por %p42, %p43
      %p46 = scmp.ne.s32.totalorder %s29, %s45
      %p47 = scmp.eq.s32.totalorder %s21, 0
      %p48 = por %p46, %p47
      %s50 = sadd.s32 %s49, 1
      %p53 = scmp.eq.s32.totalorder %s15, 1
      %p54 = scmp.ne.s32.totalorder %s49, %s51
      %p55 = scmp.eq.s32.totalorder %s15, 0
      %p56 = por %p54, %p55
      %p57 = scmp.ne.s32.totalorder %s49, %s51
      %p58 = scmp.eq.s32.totalorder %s20, 1
      %p59 = por %p57, %p58
      %p60 = scmp.ne.s32.totalorder %s51, %s52
      %p61 = scmp.eq.s32.totalorder %s20, 0
      %p62 = por %p60, %p61
      %p63 = scmp.ne.s32.totalorder %s51, %s52
      %p64 = scmp.eq.s32.totalorder %s21, 1
      %p65 = por %p63, %p64
      %p67 = scmp.ne.s32.totalorder %s52, %s66
      %p68 = scmp.eq.s32.totalorder %s21, 0
      %p69 = por %p67, %p68
      %s70 = ssub.s32 %s15, %s22
      %p71 = scmp.eq.s32.totalorder %s70, 0
      %s73 = sadd.s32 %s72, 1
      %s74 = scalar_select %p71, %s72, %s73
      %p77 = pneg %p71
      %p78 = scmp.eq.s32.totalorder %s15, 1
      %p79 = por %p77, %p78
      %p80 = scmp.ne.s32.totalorder %s72, %s75
      %p81 = scmp.eq.s32.totalorder %s15, 0
      %p82 = por %p80, %p81
      %p83 = scmp.ne.s32.totalorder %s72, %s75
      %p84 = scmp.eq.s32.totalorder %s20, 1
      %p85 = por %p83, %p84
      %p86 = scmp.ne.s32.totalorder %s75, %s76
      %p87 = scmp.eq.s32.totalorder %s20, 0
      %p88 = por %p86, %p87
      %p89 = scmp.ne.s32.totalorder %s75, %s76
      %p90 = scmp.eq.s32.totalorder %s21, 1
      %p91 = por %p89, %p90
      %p93 = scmp.ne.s32.totalorder %s76, %s92
      %p94 = scmp.eq.s32.totalorder %s21, 0
      %p95 = por %p93, %p94
      %p96 = scmp.le.s32.totalorder 1, %s15
      %p97 = scmp.lt.s32.totalorder %s15, 3
      %p98 = pnand %p96, %p97
      %p99 = pneg %p98
      // Predicated region
      $region9: #{tpu_custom_call.1} parent=5 // pred_check
        _
      $region10: #{tpu_custom_call.1} parent=5 // pred_check_branch
        %101 = sbr.rel (%p98) target = $region12
      $region11: #{tpu_custom_call.1} parent=5 // pred_region
        %s102 = ssub.s32 %s15, 1
        // Predicated region
        $region13: #{tpu_custom_call.1} parent=11 // pred_check
          %p103 = pneg %p62
        $region14: #{tpu_custom_call.1} parent=11 // pred_check_branch
          %105 = sbr.rel (%p103) target = $region16
        $region15: #{tpu_custom_call.1} parent=11 // pred_region
          %107 = vsyncadd [#allocation7], 0
          %s108 = sshll.u32 %s1, 4
          %s109 = int_to_ptr.hbm [resolvable:$true] %s108
          %s110 = sshll.u32 [#allocation6], 4
          %s111 = int_to_ptr.vmem [resolvable:$true] %s110
          %116 = dma.hbm_to_vmem [thread:$0]  %s109, 256, %s111, [#allocation7], 128, 128, 8
        $region16: #{tpu_custom_call.1} parent=11 // pred_fallthru
          _
      $region12: #{tpu_custom_call.1} parent=5 // pred_fallthru
        _
      %p117 = scmp.lt.s32.totalorder %s15, 2
      // Predicated region
      $region17: #{tpu_custom_call.1} parent=5 // pred_check
        %p118 = pneg %p117
      $region18: #{tpu_custom_call.1} parent=5 // pred_check_branch
        %120 = sbr.rel (%p118) target = $region20
      $region19: #{tpu_custom_call.1} parent=5 // pred_region
        // Predicated region
        $region21: #{tpu_custom_call.1} parent=19 // pred_check
          %p121 = pneg %p35
        $region22: #{tpu_custom_call.1} parent=19 // pred_check_branch
          %123 = sbr.rel (%p121) target = $region24
        $region23: #{tpu_custom_call.1} parent=19 // pred_region
          %s124 = sand.u32 %s25, 1
          %s125 = scalar_lea.sflag [#allocation4], %s124
          %s126 = sand.u32 %s25, 1
          %s127 = smul.addr %s126, 16
          %s128 = scalar_lea.vmem [#allocation3], %s127
          %s129 = smul.u32 2, %s15
          %131 = vsyncadd %s125, 0
          %s132 = smul.addr %s129, 8
          %s133 = scalar_lea.hbm %s0, %s132
          %s134 = sshll.u32 %s133, 4
          %s135 = int_to_ptr.hbm [resolvable:$true] %s134
          %s136 = sshll.u32 %s128, 4
          %s137 = int_to_ptr.vmem [resolvable:$true] %s136
          %142 = dma.hbm_to_vmem [thread:$0]  %s135, 256, %s137, %s125, 128, 128, 8
        $region24: #{tpu_custom_call.1} parent=19 // pred_fallthru
          _
      $region20: #{tpu_custom_call.1} parent=5 // pred_fallthru
        _
      %p143 = scmp.le.s32.totalorder 1, %s15
      %p144 = scmp.lt.s32.totalorder %s15, 3
      %p145 = pnand %p143, %p144
      %p146 = pneg %p145
      // Predicated region
      $region25: #{tpu_custom_call.1} parent=5 // pred_check
        _
      $region26: #{tpu_custom_call.1} parent=5 // pred_check_branch
        %148 = sbr.rel (%p145) target = $region28
      $region27: #{tpu_custom_call.1} parent=5 // pred_region
        %s149 = ssub.s32 %s15, 1
        %s150 = sand.u32 %s28, 1
        %s151 = scalar_lea.sflag [#allocation4], %s150
        %s152 = sand.u32 %s28, 1
        %s153 = smul.addr %s152, 16
        %s154 = scalar_lea.vmem [#allocation3], %s153
        // Predicated region
        $region29: #{tpu_custom_call.1} parent=27 // pred_check
          %p155 = pneg %p41
        $region30: #{tpu_custom_call.1} parent=27 // pred_check_branch
          %157 = sbr.rel (%p155) target = $region32
        $region31: #{tpu_custom_call.1} parent=27 // pred_region
          %159 = dma.done %s151, 256
        $region32: #{tpu_custom_call.1} parent=27 // pred_fallthru
          _
        // Predicated region
        $region33: #{tpu_custom_call.1} parent=27 // pred_check
          %p160 = pneg %p62
        $region34: #{tpu_custom_call.1} parent=27 // pred_check_branch
          %162 = sbr.rel (%p160) target = $region36
        $region35: #{tpu_custom_call.1} parent=27 // pred_region
          %164 = dma.done [#allocation7], 256
        $region36: #{tpu_custom_call.1} parent=27 // pred_fallthru
          _
        %s165 = sand.u32 %s28, 1
        %s166 = scalar_lea.sflag [#allocation4], %s165
        %s167 = sand.u32 %s28, 1
        %s168 = smul.addr %s167, 16
        %s169 = scalar_lea.vmem [#allocation3], %s168
        %p170 = pneg %p41
        %p171 = pneg %p38
        %p172 = pneg %p62
        %p173 = pneg %p59
        %p174 = pneg %p88
        %p175 = pneg %p85
        %s176 = sand.u32 %s75, 1
        %s177 = scalar_lea.sflag [#allocation5], %s176
        %s178 = sand.u32 %s75, 1
        %s179 = smul.addr %s178, 512
        %s180 = scalar_lea.vmem [#allocation8], %s179
        %s181 = smul.u32 2, %s20
        %s182 = smul.u32 64, %s20
        %v183 = vld [vmem:[%s154] sm:$0xff]
        %184 = vst [vmem:[%s180] sm:$0xff] %v183
        %v185 = vld [vmem:[%s154 + $0x8] sm:$0xff]
        %186 = vst [vmem:[#allocation2] sm:$0xff] %v185
        %v187 = vld [vmem:[#allocation6] sm:$0x1]
        %v188 = vld [vmem:[#allocation6 + $0x1] sm:$0x1]
        %v189 = vld [vmem:[%s180] sm:$0xff]
        %v190 = vld [vmem:[#allocation2] sm:$0xff]
        %v191 = vperm.slane %v187, 0
        %v192 = vmul.f32 %v189, %v191
        %v193 = vperm.slane %v188, 0
        %v194 = vmul.f32 %v190, %v193
        %v195 = vadd.f32 %v192, %v194
        %196 = vst [vmem:[%s180 + $0x8] sm:$0xff] %v195
        %v197 = vmul.f32 %v190, %v191
        %v198 = vmul.f32 %v189, %v193
        %v199 = vsub.f32 %v197, %v198
        %200 = vst [vmem:[#allocation2 + $0x8] sm:$0xff] %v199
        %v201 = vld [vmem:[#allocation6 + $0x2] sm:$0x1]
        %v202 = vld [vmem:[#allocation6 + $0x3] sm:$0x1]
        %v203 = vld [vmem:[%s180] sm:$0xff]
        %v204 = vld [vmem:[%s180 + $0x8] sm:$0xff]
        %v205 = vld [vmem:[#allocation2] sm:$0xff]
        %v206 = vld [vmem:[#allocation2 + $0x8] sm:$0xff]
        %v207 = vperm.slane %v201, 0
        %v208 = vmul.f32 %v203, %v207
        %v209 = vmul.f32 %v204, %v207
        %v210 = vperm.slane %v202, 0
        %v211 = vmul.f32 %v205, %v210
        %v212 = vmul.f32 %v206, %v210
        %v213 = vadd.f32 %v208, %v211
        %v214 = vadd.f32 %v209, %v212
        %215 = vst [vmem:[%s180 + $0x10] sm:$0xff] %v213
        %216 = vst [vmem:[%s180 + $0x18] sm:$0xff] %v214
        %v217 = vmul.f32 %v205, %v207
        %v218 = vmul.f32 %v206, %v207
        %v219 = vmul.f32 %v203, %v210
        %v220 = vmul.f32 %v204, %v210
        %v221 = vsub.f32 %v217, %v219
        %v222 = vsub.f32 %v218, %v220
        %223 = vst [vmem:[#allocation2 + $0x10] sm:$0xff] %v221
        %224 = vst [vmem:[#allocation2 + $0x18] sm:$0xff] %v222
        %v225 = vld [vmem:[#allocation6 + $0x4] sm:$0x1]
        %v226 = vld [vmem:[#allocation6 + $0x5] sm:$0x1]
        %v227 = vld [vmem:[%s180] sm:$0xff]
        %v228 = vld [vmem:[%s180 + $0x8] sm:$0xff]
        %v229 = vld [vmem:[%s180 + $0x10] sm:$0xff]
        %v230 = vld [vmem:[%s180 + $0x18] sm:$0xff]
        %v231 = vld [vmem:[#allocation2] sm:$0xff]
        %v232 = vld [vmem:[#allocation2 + $0x8] sm:$0xff]
        %v233 = vld [vmem:[#allocation2 + $0x10] sm:$0xff]
        %v234 = vld [vmem:[#allocation2 + $0x18] sm:$0xff]
        %v235 = vperm.slane %v225, 0
        %v236 = vmul.f32 %v227, %v235
        %v237 = vmul.f32 %v228, %v235
        %v238 = vmul.f32 %v229, %v235
        %v239 = vmul.f32 %v230, %v235
        %v240 = vperm.slane %v226, 0
        %v241 = vmul.f32 %v231, %v240
        %v242 = vmul.f32 %v232, %v240
        %v243 = vmul.f32 %v233, %v240
        %v244 = vmul.f32 %v234, %v240
        %v245 = vadd.f32 %v236, %v241
        %v246 = vadd.f32 %v237, %v242
        %v247 = vadd.f32 %v238, %v243
        %v248 = vadd.f32 %v239, %v244
        %249 = vst [vmem:[%s180 + $0x20] sm:$0xff] %v245
        %250 = vst [vmem:[%s180 + $0x28] sm:$0xff] %v246
        %251 = vst [vmem:[%s180 + $0x30] sm:$0xff] %v247
        %252 = vst [vmem:[%s180 + $0x38] sm:$0xff] %v248
        %v253 = vmul.f32 %v231, %v235
        %v254 = vmul.f32 %v232, %v235
        %v255 = vmul.f32 %v233, %v235
        %v256 = vmul.f32 %v234, %v235
        %v257 = vmul.f32 %v227, %v240
        %v258 = vmul.f32 %v228, %v240
        %v259 = vmul.f32 %v229, %v240
        %v260 = vmul.f32 %v230, %v240
        %v261 = vsub.f32 %v253, %v257
        %v262 = vsub.f32 %v254, %v258
        %v263 = vsub.f32 %v255, %v259
        %v264 = vsub.f32 %v256, %v260
        %265 = vst [vmem:[#allocation2 + $0x20] sm:$0xff] %v261
        %266 = vst [vmem:[#allocation2 + $0x28] sm:$0xff] %v262
        %267 = vst [vmem:[#allocation2 + $0x30] sm:$0xff] %v263
        %268 = vst [vmem:[#allocation2 + $0x38] sm:$0xff] %v264
        %v269 = vld [vmem:[#allocation6 + $0x6] sm:$0x1]
        %v270 = vld [vmem:[#allocation6 + $0x7] sm:$0x1]
        %v271 = vld [vmem:[%s180] sm:$0xff]
        %v272 = vld [vmem:[%s180 + $0x8] sm:$0xff]
        %v273 = vld [vmem:[%s180 + $0x10] sm:$0xff]
        %v274 = vld [vmem:[%s180 + $0x18] sm:$0xff]
        %v275 = vld [vmem:[%s180 + $0x20] sm:$0xff]
        %v276 = vld [vmem:[%s180 + $0x28] sm:$0xff]
        %v277 = vld [vmem:[%s180 + $0x30] sm:$0xff]
        %v278 = vld [vmem:[%s180 + $0x38] sm:$0xff]
        %v279 = vld [vmem:[#allocation2] sm:$0xff]
        %v280 = vld [vmem:[#allocation2 + $0x8] sm:$0xff]
        %v281 = vld [vmem:[#allocation2 + $0x10] sm:$0xff]
        %v282 = vld [vmem:[#allocation2 + $0x18] sm:$0xff]
        %v283 = vld [vmem:[#allocation2 + $0x20] sm:$0xff]
        %v284 = vld [vmem:[#allocation2 + $0x28] sm:$0xff]
        %v285 = vld [vmem:[#allocation2 + $0x30] sm:$0xff]
        %v286 = vld [vmem:[#allocation2 + $0x38] sm:$0xff]
        %v287 = vperm.slane %v269, 0
        %v288 = vmul.f32 %v271, %v287
        %v289 = vmul.f32 %v272, %v287
        %v290 = vmul.f32 %v273, %v287
        %v291 = vmul.f32 %v274, %v287
        %v292 = vmul.f32 %v275, %v287
        %v293 = vmul.f32 %v276, %v287
        %v294 = vmul.f32 %v277, %v287
        %v295 = vmul.f32 %v278, %v287
        %v296 = vperm.slane %v270, 0
        %v297 = vmul.f32 %v279, %v296
        %v298 = vmul.f32 %v280, %v296
        %v299 = vmul.f32 %v281, %v296
        %v300 = vmul.f32 %v282, %v296
        %v301 = vmul.f32 %v283, %v296
        %v302 = vmul.f32 %v284, %v296
        %v303 = vmul.f32 %v285, %v296
        %v304 = vmul.f32 %v286, %v296
        %v305 = vadd.f32 %v288, %v297
        %v306 = vadd.f32 %v289, %v298
        %v307 = vadd.f32 %v290, %v299
        %v308 = vadd.f32 %v291, %v300
        %v309 = vadd.f32 %v292, %v301
        %v310 = vadd.f32 %v293, %v302
        %v311 = vadd.f32 %v294, %v303
        %v312 = vadd.f32 %v295, %v304
        %313 = vst [vmem:[%s180 + $0x40] sm:$0xff] %v305
        %314 = vst [vmem:[%s180 + $0x48] sm:$0xff] %v306
        %315 = vst [vmem:[%s180 + $0x50] sm:$0xff] %v307
        %316 = vst [vmem:[%s180 + $0x58] sm:$0xff] %v308
        %317 = vst [vmem:[%s180 + $0x60] sm:$0xff] %v309
        %318 = vst [vmem:[%s180 + $0x68] sm:$0xff] %v310
        %319 = vst [vmem:[%s180 + $0x70] sm:$0xff] %v311
        %320 = vst [vmem:[%s180 + $0x78] sm:$0xff] %v312
        %v321 = vmul.f32 %v279, %v287
        %v322 = vmul.f32 %v280, %v287
        %v323 = vmul.f32 %v281, %v287
        %v324 = vmul.f32 %v282, %v287
        %v325 = vmul.f32 %v283, %v287
        %v326 = vmul.f32 %v284, %v287
        %v327 = vmul.f32 %v285, %v287
        %v328 = vmul.f32 %v286, %v287
        %v329 = vmul.f32 %v271, %v296
        %v330 = vmul.f32 %v272, %v296
        %v331 = vmul.f32 %v273, %v296
        %v332 = vmul.f32 %v274, %v296
        %v333 = vmul.f32 %v275, %v296
        %v334 = vmul.f32 %v276, %v296
        %v335 = vmul.f32 %v277, %v296
        %v336 = vmul.f32 %v278, %v296
        %v337 = vsub.f32 %v321, %v329
        %v338 = vsub.f32 %v322, %v330
        %v339 = vsub.f32 %v323, %v331
        %v340 = vsub.f32 %v324, %v332
        %v341 = vsub.f32 %v325, %v333
        %v342 = vsub.f32 %v326, %v334
        %v343 = vsub.f32 %v327, %v335
        %v344 = vsub.f32 %v328, %v336
        %345 = vst [vmem:[#allocation2 + $0x40] sm:$0xff] %v337
        %346 = vst [vmem:[#allocation2 + $0x48] sm:$0xff] %v338
        %347 = vst [vmem:[#allocation2 + $0x50] sm:$0xff] %v339
        %348 = vst [vmem:[#allocation2 + $0x58] sm:$0xff] %v340
        %349 = vst [vmem:[#allocation2 + $0x60] sm:$0xff] %v341
        %350 = vst [vmem:[#allocation2 + $0x68] sm:$0xff] %v342
        %351 = vst [vmem:[#allocation2 + $0x70] sm:$0xff] %v343
        %352 = vst [vmem:[#allocation2 + $0x78] sm:$0xff] %v344
        %v353 = vld [vmem:[#allocation6 + $0x8] sm:$0x1]
        %v354 = vld [vmem:[#allocation6 + $0x9] sm:$0x1]
        %v355 = vld [vmem:[%s180] sm:$0xff]
        %v356 = vld [vmem:[%s180 + $0x8] sm:$0xff]
        %v357 = vld [vmem:[%s180 + $0x10] sm:$0xff]
        %v358 = vld [vmem:[%s180 + $0x18] sm:$0xff]
        %v359 = vld [vmem:[%s180 + $0x20] sm:$0xff]
        %v360 = vld [vmem:[%s180 + $0x28] sm:$0xff]
        %v361 = vld [vmem:[%s180 + $0x30] sm:$0xff]
        %v362 = vld [vmem:[%s180 + $0x38] sm:$0xff]
        %v363 = vld [vmem:[%s180 + $0x40] sm:$0xff]
        %v364 = vld [vmem:[%s180 + $0x48] sm:$0xff]
        %v365 = vld [vmem:[%s180 + $0x50] sm:$0xff]
        %v366 = vld [vmem:[%s180 + $0x58] sm:$0xff]
        %v367 = vld [vmem:[%s180 + $0x60] sm:$0xff]
        %v368 = vld [vmem:[%s180 + $0x68] sm:$0xff]
        %v369 = vld [vmem:[%s180 + $0x70] sm:$0xff]
        %v370 = vld [vmem:[%s180 + $0x78] sm:$0xff]
        %v371 = vld [vmem:[#allocation2] sm:$0xff]
        %v372 = vld [vmem:[#allocation2 + $0x8] sm:$0xff]
        %v373 = vld [vmem:[#allocation2 + $0x10] sm:$0xff]
        %v374 = vld [vmem:[#allocation2 + $0x18] sm:$0xff]
        %v375 = vld [vmem:[#allocation2 + $0x20] sm:$0xff]
        %v376 = vld [vmem:[#allocation2 + $0x28] sm:$0xff]
        %v377 = vld [vmem:[#allocation2 + $0x30] sm:$0xff]
        %v378 = vld [vmem:[#allocation2 + $0x38] sm:$0xff]
        %v379 = vld [vmem:[#allocation2 + $0x40] sm:$0xff]
        %v380 = vld [vmem:[#allocation2 + $0x48] sm:$0xff]
        %v381 = vld [vmem:[#allocation2 + $0x50] sm:$0xff]
        %v382 = vld [vmem:[#allocation2 + $0x58] sm:$0xff]
        %v383 = vld [vmem:[#allocation2 + $0x60] sm:$0xff]
        %v384 = vld [vmem:[#allocation2 + $0x68] sm:$0xff]
        %v385 = vld [vmem:[#allocation2 + $0x70] sm:$0xff]
        %v386 = vld [vmem:[#allocation2 + $0x78] sm:$0xff]
        %v387 = vperm.slane %v353, 0
        %v388 = vmul.f32 %v355, %v387
        %v389 = vmul.f32 %v356, %v387
        %v390 = vmul.f32 %v357, %v387
        %v391 = vmul.f32 %v358, %v387
        %v392 = vmul.f32 %v359, %v387
        %v393 = vmul.f32 %v360, %v387
        %v394 = vmul.f32 %v361, %v387
        %v395 = vmul.f32 %v362, %v387
        %v396 = vmul.f32 %v363, %v387
        %v397 = vmul.f32 %v364, %v387
        %v398 = vmul.f32 %v365, %v387
        %v399 = vmul.f32 %v366, %v387
        %v400 = vmul.f32 %v367, %v387
        %v401 = vmul.f32 %v368, %v387
        %v402 = vmul.f32 %v369, %v387
        %v403 = vmul.f32 %v370, %v387
        %v404 = vperm.slane %v354, 0
        %v405 = vmul.f32 %v371, %v404
        %v406 = vmul.f32 %v372, %v404
        %v407 = vmul.f32 %v373, %v404
        %v408 = vmul.f32 %v374, %v404
        %v409 = vmul.f32 %v375, %v404
        %v410 = vmul.f32 %v376, %v404
        %v411 = vmul.f32 %v377, %v404
        %v412 = vmul.f32 %v378, %v404
        %v413 = vmul.f32 %v379, %v404
        %v414 = vmul.f32 %v380, %v404
        %v415 = vmul.f32 %v381, %v404
        %v416 = vmul.f32 %v382, %v404
        %v417 = vmul.f32 %v383, %v404
        %v418 = vmul.f32 %v384, %v404
        %v419 = vmul.f32 %v385, %v404
        %v420 = vmul.f32 %v386, %v404
        %v421 = vadd.f32 %v388, %v405
        %v422 = vadd.f32 %v389, %v406
        %v423 = vadd.f32 %v390, %v407
        %v424 = vadd.f32 %v391, %v408
        %v425 = vadd.f32 %v392, %v409
        %v426 = vadd.f32 %v393, %v410
        %v427 = vadd.f32 %v394, %v411
        %v428 = vadd.f32 %v395, %v412
        %v429 = vadd.f32 %v396, %v413
        %v430 = vadd.f32 %v397, %v414
        %v431 = vadd.f32 %v398, %v415
        %v432 = vadd.f32 %v399, %v416
        %v433 = vadd.f32 %v400, %v417
        %v434 = vadd.f32 %v401, %v418
        %v435 = vadd.f32 %v402, %v419
        %v436 = vadd.f32 %v403, %v420
        %437 = vst [vmem:[%s180 + $0x80] sm:$0xff] %v421
        %438 = vst [vmem:[%s180 + $0x88] sm:$0xff] %v422
        %439 = vst [vmem:[%s180 + $0x90] sm:$0xff] %v423
        %440 = vst [vmem:[%s180 + $0x98] sm:$0xff] %v424
        %441 = vst [vmem:[%s180 + $0xa0] sm:$0xff] %v425
        %442 = vst [vmem:[%s180 + $0xa8] sm:$0xff] %v426
        %443 = vst [vmem:[%s180 + $0xb0] sm:$0xff] %v427
        %444 = vst [vmem:[%s180 + $0xb8] sm:$0xff] %v428
        %445 = vst [vmem:[%s180 + $0xc0] sm:$0xff] %v429
        %446 = vst [vmem:[%s180 + $0xc8] sm:$0xff] %v430
        %447 = vst [vmem:[%s180 + $0xd0] sm:$0xff] %v431
        %448 = vst [vmem:[%s180 + $0xd8] sm:$0xff] %v432
        %449 = vst [vmem:[%s180 + $0xe0] sm:$0xff] %v433
        %450 = vst [vmem:[%s180 + $0xe8] sm:$0xff] %v434
        %451 = vst [vmem:[%s180 + $0xf0] sm:$0xff] %v435
        %452 = vst [vmem:[%s180 + $0xf8] sm:$0xff] %v436
        %v453 = vmul.f32 %v371, %v387
        %v454 = vmul.f32 %v372, %v387
        %v455 = vmul.f32 %v373, %v387
        %v456 = vmul.f32 %v374, %v387
        %v457 = vmul.f32 %v375, %v387
        %v458 = vmul.f32 %v376, %v387
        %v459 = vmul.f32 %v377, %v387
        %v460 = vmul.f32 %v378, %v387
        %v461 = vmul.f32 %v379, %v387
        %v462 = vmul.f32 %v380, %v387
        %v463 = vmul.f32 %v381, %v387
        %v464 = vmul.f32 %v382, %v387
        %v465 = vmul.f32 %v383, %v387
        %v466 = vmul.f32 %v384, %v387
        %v467 = vmul.f32 %v385, %v387
        %v468 = vmul.f32 %v386, %v387
        %v469 = vmul.f32 %v355, %v404
        %v470 = vmul.f32 %v356, %v404
        %v471 = vmul.f32 %v357, %v404
        %v472 = vmul.f32 %v358, %v404
        %v473 = vmul.f32 %v359, %v404
        %v474 = vmul.f32 %v360, %v404
        %v475 = vmul.f32 %v361, %v404
        %v476 = vmul.f32 %v362, %v404
        %v477 = vmul.f32 %v363, %v404
        %v478 = vmul.f32 %v364, %v404
        %v479 = vmul.f32 %v365, %v404
        %v480 = vmul.f32 %v366, %v404
        %v481 = vmul.f32 %v367, %v404
        %v482 = vmul.f32 %v368, %v404
        %v483 = vmul.f32 %v369, %v404
        %v484 = vmul.f32 %v370, %v404
        %v485 = vsub.f32 %v453, %v469
        %v486 = vsub.f32 %v454, %v470
        %v487 = vsub.f32 %v455, %v471
        %v488 = vsub.f32 %v456, %v472
        %v489 = vsub.f32 %v457, %v473
        %v490 = vsub.f32 %v458, %v474
        %v491 = vsub.f32 %v459, %v475
        %v492 = vsub.f32 %v460, %v476
        %v493 = vsub.f32 %v461, %v477
        %v494 = vsub.f32 %v462, %v478
        %v495 = vsub.f32 %v463, %v479
        %v496 = vsub.f32 %v464, %v480
        %v497 = vsub.f32 %v465, %v481
        %v498 = vsub.f32 %v466, %v482
        %v499 = vsub.f32 %v467, %v483
        %v500 = vsub.f32 %v468, %v484
        %501 = vst [vmem:[#allocation2 + $0x80] sm:$0xff] %v485
        %502 = vst [vmem:[#allocation2 + $0x88] sm:$0xff] %v486
        %503 = vst [vmem:[#allocation2 + $0x90] sm:$0xff] %v487
        %504 = vst [vmem:[#allocation2 + $0x98] sm:$0xff] %v488
        %505 = vst [vmem:[#allocation2 + $0xa0] sm:$0xff] %v489
        %506 = vst [vmem:[#allocation2 + $0xa8] sm:$0xff] %v490
        %507 = vst [vmem:[#allocation2 + $0xb0] sm:$0xff] %v491
        %508 = vst [vmem:[#allocation2 + $0xb8] sm:$0xff] %v492
        %509 = vst [vmem:[#allocation2 + $0xc0] sm:$0xff] %v493
        %510 = vst [vmem:[#allocation2 + $0xc8] sm:$0xff] %v494
        %511 = vst [vmem:[#allocation2 + $0xd0] sm:$0xff] %v495
        %512 = vst [vmem:[#allocation2 + $0xd8] sm:$0xff] %v496
        %513 = vst [vmem:[#allocation2 + $0xe0] sm:$0xff] %v497
        %514 = vst [vmem:[#allocation2 + $0xe8] sm:$0xff] %v498
        %515 = vst [vmem:[#allocation2 + $0xf0] sm:$0xff] %v499
        %516 = vst [vmem:[#allocation2 + $0xf8] sm:$0xff] %v500
        %v517 = vld [vmem:[#allocation6 + $0xa] sm:$0x1]
        %v518 = vld [vmem:[#allocation6 + $0xb] sm:$0x1]
        %v519 = vld [vmem:[%s180] sm:$0xff]
        %v520 = vld [vmem:[%s180 + $0x8] sm:$0xff]
        %v521 = vld [vmem:[%s180 + $0x10] sm:$0xff]
        %v522 = vld [vmem:[%s180 + $0x18] sm:$0xff]
        %v523 = vld [vmem:[%s180 + $0x20] sm:$0xff]
        %v524 = vld [vmem:[%s180 + $0x28] sm:$0xff]
        %v525 = vld [vmem:[%s180 + $0x30] sm:$0xff]
        %v526 = vld [vmem:[%s180 + $0x38] sm:$0xff]
        %v527 = vld [vmem:[%s180 + $0x40] sm:$0xff]
        %v528 = vld [vmem:[%s180 + $0x48] sm:$0xff]
        %v529 = vld [vmem:[%s180 + $0x50] sm:$0xff]
        %v530 = vld [vmem:[%s180 + $0x58] sm:$0xff]
        %v531 = vld [vmem:[%s180 + $0x60] sm:$0xff]
        %v532 = vld [vmem:[%s180 + $0x68] sm:$0xff]
        %v533 = vld [vmem:[%s180 + $0x70] sm:$0xff]
        %v534 = vld [vmem:[%s180 + $0x78] sm:$0xff]
        %v535 = vld [vmem:[%s180 + $0x80] sm:$0xff]
        %v536 = vld [vmem:[%s180 + $0x88] sm:$0xff]
        %v537 = vld [vmem:[%s180 + $0x90] sm:$0xff]
        %v538 = vld [vmem:[%s180 + $0x98] sm:$0xff]
        %v539 = vld [vmem:[%s180 + $0xa0] sm:$0xff]
        %v540 = vld [vmem:[%s180 + $0xa8] sm:$0xff]
        %v541 = vld [vmem:[%s180 + $0xb0] sm:$0xff]
        %v542 = vld [vmem:[%s180 + $0xb8] sm:$0xff]
        %v543 = vld [vmem:[%s180 + $0xc0] sm:$0xff]
        %v544 = vld [vmem:[%s180 + $0xc8] sm:$0xff]
        %v545 = vld [vmem:[%s180 + $0xd0] sm:$0xff]
        %v546 = vld [vmem:[%s180 + $0xd8] sm:$0xff]
        %v547 = vld [vmem:[%s180 + $0xe0] sm:$0xff]
        %v548 = vld [vmem:[%s180 + $0xe8] sm:$0xff]
        %v549 = vld [vmem:[%s180 + $0xf0] sm:$0xff]
        %v550 = vld [vmem:[%s180 + $0xf8] sm:$0xff]
        %v551 = vld [vmem:[#allocation2] sm:$0xff]
        %v552 = vld [vmem:[#allocation2 + $0x8] sm:$0xff]
        %v553 = vld [vmem:[#allocation2 + $0x10] sm:$0xff]
        %v554 = vld [vmem:[#allocation2 + $0x18] sm:$0xff]
        %v555 = vld [vmem:[#allocation2 + $0x20] sm:$0xff]
        %v556 = vld [vmem:[#allocation2 + $0x28] sm:$0xff]
        %v557 = vld [vmem:[#allocation2 + $0x30] sm:$0xff]
        %v558 = vld [vmem:[#allocation2 + $0x38] sm:$0xff]
        %v559 = vld [vmem:[#allocation2 + $0x40] sm:$0xff]
        %v560 = vld [vmem:[#allocation2 + $0x48] sm:$0xff]
        %v561 = vld [vmem:[#allocation2 + $0x50] sm:$0xff]
        %v562 = vld [vmem:[#allocation2 + $0x58] sm:$0xff]
        %v563 = vld [vmem:[#allocation2 + $0x60] sm:$0xff]
        %v564 = vld [vmem:[#allocation2 + $0x68] sm:$0xff]
        %v565 = vld [vmem:[#allocation2 + $0x70] sm:$0xff]
        %v566 = vld [vmem:[#allocation2 + $0x78] sm:$0xff]
        %v567 = vld [vmem:[#allocation2 + $0x80] sm:$0xff]
        %v568 = vld [vmem:[#allocation2 + $0x88] sm:$0xff]
        %v569 = vld [vmem:[#allocation2 + $0x90] sm:$0xff]
        %v570 = vld [vmem:[#allocation2 + $0x98] sm:$0xff]
        %v571 = vld [vmem:[#allocation2 + $0xa0] sm:$0xff]
        %v572 = vld [vmem:[#allocation2 + $0xa8] sm:$0xff]
        %v573 = vld [vmem:[#allocation2 + $0xb0] sm:$0xff]
        %v574 = vld [vmem:[#allocation2 + $0xb8] sm:$0xff]
        %v575 = vld [vmem:[#allocation2 + $0xc0] sm:$0xff]
        %v576 = vld [vmem:[#allocation2 + $0xc8] sm:$0xff]
        %v577 = vld [vmem:[#allocation2 + $0xd0] sm:$0xff]
        %v578 = vld [vmem:[#allocation2 + $0xd8] sm:$0xff]
        %v579 = vld [vmem:[#allocation2 + $0xe0] sm:$0xff]
        %v580 = vld [vmem:[#allocation2 + $0xe8] sm:$0xff]
        %v581 = vld [vmem:[#allocation2 + $0xf0] sm:$0xff]
        %v582 = vld [vmem:[#allocation2 + $0xf8] sm:$0xff]
        %v583 = vperm.slane %v517, 0
        %v584 = vmul.f32 %v519, %v583
        %v585 = vmul.f32 %v520, %v583
        %v586 = vmul.f32 %v521, %v583
        %v587 = vmul.f32 %v522, %v583
        %v588 = vmul.f32 %v523, %v583
        %v589 = vmul.f32 %v524, %v583
        %v590 = vmul.f32 %v525, %v583
        %v591 = vmul.f32 %v526, %v583
        %v592 = vmul.f32 %v527, %v583
        %v593 = vmul.f32 %v528, %v583
        %v594 = vmul.f32 %v529, %v583
        %v595 = vmul.f32 %v530, %v583
        %v596 = vmul.f32 %v531, %v583
        %v597 = vmul.f32 %v532, %v583
        %v598 = vmul.f32 %v533, %v583
        %v599 = vmul.f32 %v534, %v583
        %v600 = vmul.f32 %v535, %v583
        %v601 = vmul.f32 %v536, %v583
        %v602 = vmul.f32 %v537, %v583
        %v603 = vmul.f32 %v538, %v583
        %v604 = vmul.f32 %v539, %v583
        %v605 = vmul.f32 %v540, %v583
        %v606 = vmul.f32 %v541, %v583
        %v607 = vmul.f32 %v542, %v583
        %v608 = vmul.f32 %v543, %v583
        %v609 = vmul.f32 %v544, %v583
        %v610 = vmul.f32 %v545, %v583
        %v611 = vmul.f32 %v546, %v583
        %v612 = vmul.f32 %v547, %v583
        %v613 = vmul.f32 %v548, %v583
        %v614 = vmul.f32 %v549, %v583
        %v615 = vmul.f32 %v550, %v583
        %v616 = vperm.slane %v518, 0
        %v617 = vmul.f32 %v551, %v616
        %v618 = vmul.f32 %v552, %v616
        %v619 = vmul.f32 %v553, %v616
        %v620 = vmul.f32 %v554, %v616
        %v621 = vmul.f32 %v555, %v616
        %v622 = vmul.f32 %v556, %v616
        %v623 = vmul.f32 %v557, %v616
        %v624 = vmul.f32 %v558, %v616
        %v625 = vmul.f32 %v559, %v616
        %v626 = vmul.f32 %v560, %v616
        %v627 = vmul.f32 %v561, %v616
        %v628 = vmul.f32 %v562, %v616
        %v629 = vmul.f32 %v563, %v616
        %v630 = vmul.f32 %v564, %v616
        %v631 = vmul.f32 %v565, %v616
        %v632 = vmul.f32 %v566, %v616
        %v633 = vmul.f32 %v567, %v616
        %v634 = vmul.f32 %v568, %v616
        %v635 = vmul.f32 %v569, %v616
        %v636 = vmul.f32 %v570, %v616
        %v637 = vmul.f32 %v571, %v616
        %v638 = vmul.f32 %v572, %v616
        %v639 = vmul.f32 %v573, %v616
        %v640 = vmul.f32 %v574, %v616
        %v641 = vmul.f32 %v575, %v616
        %v642 = vmul.f32 %v576, %v616
        %v643 = vmul.f32 %v577, %v616
        %v644 = vmul.f32 %v578, %v616
        %v645 = vmul.f32 %v579, %v616
        %v646 = vmul.f32 %v580, %v616
        %v647 = vmul.f32 %v581, %v616
        %v648 = vmul.f32 %v582, %v616
        %v649 = vadd.f32 %v584, %v617
        %v650 = vadd.f32 %v585, %v618
        %v651 = vadd.f32 %v586, %v619
        %v652 = vadd.f32 %v587, %v620
        %v653 = vadd.f32 %v588, %v621
        %v654 = vadd.f32 %v589, %v622
        %v655 = vadd.f32 %v590, %v623
        %v656 = vadd.f32 %v591, %v624
        %v657 = vadd.f32 %v592, %v625
        %v658 = vadd.f32 %v593, %v626
        %v659 = vadd.f32 %v594, %v627
        %v660 = vadd.f32 %v595, %v628
        %v661 = vadd.f32 %v596, %v629
        %v662 = vadd.f32 %v597, %v630
        %v663 = vadd.f32 %v598, %v631
        %v664 = vadd.f32 %v599, %v632
        %v665 = vadd.f32 %v600, %v633
        %v666 = vadd.f32 %v601, %v634
        %v667 = vadd.f32 %v602, %v635
        %v668 = vadd.f32 %v603, %v636
        %v669 = vadd.f32 %v604, %v637
        %v670 = vadd.f32 %v605, %v638
        %v671 = vadd.f32 %v606, %v639
        %v672 = vadd.f32 %v607, %v640
        %v673 = vadd.f32 %v608, %v641
        %v674 = vadd.f32 %v609, %v642
        %v675 = vadd.f32 %v610, %v643
        %v676 = vadd.f32 %v611, %v644
        %v677 = vadd.f32 %v612, %v645
        %v678 = vadd.f32 %v613, %v646
        %v679 = vadd.f32 %v614, %v647
        %v680 = vadd.f32 %v615, %v648
        %681 = vst [vmem:[%s180 + $0x100] sm:$0xff] %v649
        %682 = vst [vmem:[%s180 + $0x108] sm:$0xff] %v650
        %683 = vst [vmem:[%s180 + $0x110] sm:$0xff] %v651
        %684 = vst [vmem:[%s180 + $0x118] sm:$0xff] %v652
        %685 = vst [vmem:[%s180 + $0x120] sm:$0xff] %v653
        %686 = vst [vmem:[%s180 + $0x128] sm:$0xff] %v654
        %687 = vst [vmem:[%s180 + $0x130] sm:$0xff] %v655
        %688 = vst [vmem:[%s180 + $0x138] sm:$0xff] %v656
        %689 = vst [vmem:[%s180 + $0x140] sm:$0xff] %v657
        %690 = vst [vmem:[%s180 + $0x148] sm:$0xff] %v658
        %691 = vst [vmem:[%s180 + $0x150] sm:$0xff] %v659
        %692 = vst [vmem:[%s180 + $0x158] sm:$0xff] %v660
        %693 = vst [vmem:[%s180 + $0x160] sm:$0xff] %v661
        %694 = vst [vmem:[%s180 + $0x168] sm:$0xff] %v662
        %695 = vst [vmem:[%s180 + $0x170] sm:$0xff] %v663
        %696 = vst [vmem:[%s180 + $0x178] sm:$0xff] %v664
        %697 = vst [vmem:[%s180 + $0x180] sm:$0xff] %v665
        %698 = vst [vmem:[%s180 + $0x188] sm:$0xff] %v666
        %699 = vst [vmem:[%s180 + $0x190] sm:$0xff] %v667
        %700 = vst [vmem:[%s180 + $0x198] sm:$0xff] %v668
        %701 = vst [vmem:[%s180 + $0x1a0] sm:$0xff] %v669
        %702 = vst [vmem:[%s180 + $0x1a8] sm:$0xff] %v670
        %703 = vst [vmem:[%s180 + $0x1b0] sm:$0xff] %v671
        %704 = vst [vmem:[%s180 + $0x1b8] sm:$0xff] %v672
        %705 = vst [vmem:[%s180 + $0x1c0] sm:$0xff] %v673
        %706 = vst [vmem:[%s180 + $0x1c8] sm:$0xff] %v674
        %707 = vst [vmem:[%s180 + $0x1d0] sm:$0xff] %v675
        %708 = vst [vmem:[%s180 + $0x1d8] sm:$0xff] %v676
        %709 = vst [vmem:[%s180 + $0x1e0] sm:$0xff] %v677
        %710 = vst [vmem:[%s180 + $0x1e8] sm:$0xff] %v678
        %711 = vst [vmem:[%s180 + $0x1f0] sm:$0xff] %v679
        %712 = vst [vmem:[%s180 + $0x1f8] sm:$0xff] %v680
        %s713 = sand.u32 %s75, 1
        %s714 = scalar_lea.sflag [#allocation5], %s713
        %s715 = sand.u32 %s75, 1
        %s716 = smul.addr %s715, 512
        %s717 = scalar_lea.vmem [#allocation8], %s716
        // Predicated region
        $region37: #{tpu_custom_call.1} parent=27 // pred_check
          %p718 = pneg %p85
        $region38: #{tpu_custom_call.1} parent=27 // pred_check_branch
          %720 = sbr.rel (%p718) target = $region40
        $region39: #{tpu_custom_call.1} parent=27 // pred_region
          %s721 = smul.u32 64, %s20
          %723 = vsyncadd %s714, 0
          %s724 = smul.addr %s721, 8
          %s725 = scalar_lea.hbm %s2, %s724
          %s726 = sshll.u32 %s717, 4
          %s727 = int_to_ptr.vmem [resolvable:$true] %s726
          %s728 = sshll.u32 %s725, 4
          %s729 = int_to_ptr.hbm [resolvable:$true] %s728
          %734 = dma.vmem_to_hbm [thread:$0]  %s727, 8192, %s729, %s714, 128, 128, 8
        $region40: #{tpu_custom_call.1} parent=27 // pred_fallthru
          _
      $region28: #{tpu_custom_call.1} parent=5 // pred_fallthru
        _
      %p735 = scmp.le.s32.totalorder 2, %s15
      // Predicated region
      $region41: #{tpu_custom_call.1} parent=5 // pred_check
        %p736 = pneg %p735
      $region42: #{tpu_custom_call.1} parent=5 // pred_check_branch
        %738 = sbr.rel (%p736) target = $region44
      $region43: #{tpu_custom_call.1} parent=5 // pred_region
        %s739 = ssub.s32 %s15, 2
        // Predicated region
        $region45: #{tpu_custom_call.1} parent=43 // pred_check
          %p740 = pneg %p91
        $region46: #{tpu_custom_call.1} parent=43 // pred_check_branch
          %742 = sbr.rel (%p740) target = $region48
        $region47: #{tpu_custom_call.1} parent=43 // pred_region
          %s743 = sand.u32 %s76, 1
          %s744 = scalar_lea.sflag [#allocation5], %s743
          %s745 = sand.u32 %s76, 1
          %s746 = smul.addr %s745, 512
          %s747 = scalar_lea.vmem [#allocation8], %s746
          %749 = dma.done %s744, 8192
        $region48: #{tpu_custom_call.1} parent=43 // pred_fallthru
          _
      $region44: #{tpu_custom_call.1} parent=5 // pred_fallthru
        _
    $region6: #{tpu_custom_call.1} parent=1 // loop_footer
      %s19 = sadd.s32 1, %s15
    $region7: #{tpu_custom_call.1} parent=1 // loop_footer_branch
      %14 = sbr.rel target = $region3
    $region8: #{tpu_custom_call.1} parent=1 // loop_exit
      _
    %750 = vsyncpa [#allocation4], 1
    %s751 = scalar_lea.sflag [#allocation4], 1
    %752 = vsyncpa %s751, 1
    %753 = vsyncpa [#allocation7], 1
    %754 = vsyncpa [#allocation5], 1
    %s755 = scalar_lea.sflag [#allocation5], 1
    %756 = vsyncpa %s755, 1

</llo_original>
